<compile_context>
chip_gen: v6e
topology: v6e:2x2x1
jax: 0.10.0
libtpu: 0.0.40
codegen_flags: <defaults>
</compile_context>

<pallas_src>
import jax
import jax.numpy as jnp
from jax.experimental import pallas as pl
from jax.experimental.pallas import tpu as pltpu

_LANES = 128


# ----------------------------------------------------------------------------
# Kernel: elementwise Mish on one (block_rows, 128) tile.
# ----------------------------------------------------------------------------
def _mish_kernel(x_ref, o_ref):
    x = x_ref[...].astype(jnp.float32)
    # tanh(softplus(x)) == t*(t+2) / (t*(t+2) + 2) with t = e^x.
    # Clamp the exponent: for x >= 20 the ratio is already 1.0 to f32
    # precision, and the clamp keeps e^{2x} finite (no inf/inf -> NaN).
    t = jnp.exp(jnp.minimum(x, 20.0))        # EUP (single transcendental)
    num = t * (t + 2.0)                      # VPU
    ratio = num / (num + 2.0)                # EUP recip + VPU Newton refine
    o_ref[...] = (x * ratio).astype(o_ref.dtype)


# ----------------------------------------------------------------------------
# Wrapper helpers
# ----------------------------------------------------------------------------
def _min_sublane(dtype) -> int:
    # f32 -> 8, bf16 -> 16, int8/fp8 -> 32 minimum sublane tile.
    return max(8, 32 // jnp.dtype(dtype).itemsize)


def _round_up(v: int, m: int) -> int:
    return -(-v // m) * m


def _mish_2d(x2, block_rows: int):
    rows, lanes = x2.shape
    grid = (pl.cdiv(rows, block_rows),)
    return pl.pallas_call(
        _mish_kernel,
        out_shape=jax.ShapeDtypeStruct(x2.shape, x2.dtype),
        grid=grid,
        in_specs=[pl.BlockSpec((block_rows, lanes), lambda i: (i, 0))],
        out_specs=pl.BlockSpec((block_rows, lanes), lambda i: (i, 0)),
        compiler_params=pltpu.CompilerParams(
            dimension_semantics=("parallel",)),
    )(x2)


def _pick_block_rows(rows: int, requested: int, sub: int) -> int:
    # Cap at requested (VMEM), keep sublane aligned, and aim for >=2 grid
    # steps so both v7x TensorCores get work on medium tensors.
    half = max(sub, _round_up(pl.cdiv(rows, 2), sub))
    return min(_round_up(requested, sub), half)


# ----------------------------------------------------------------------------
# Public entry: Mish on an arbitrarily shaped tensor.
# ----------------------------------------------------------------------------
def mish(x, *, block_rows: int = 2048):
    orig_shape = x.shape
    n = x.size
    if n == 0:
        return x

    sub = _min_sublane(x.dtype)

    if n % _LANES == 0:
        # Common path: reshape of contiguous data is free — no pad, no slice.
        rows = n // _LANES
        br = _pick_block_rows(rows, block_rows, sub)
        out = _mish_2d(x.reshape(rows, _LANES), br)
        return out.reshape(orig_shape)

    # Ragged lane tail (n % 128 != 0): rare fallback — pad the flat vector to
    # full 128-lane rows, run, slice back.  Zero padding is harmless (values
    # are discarded by the slice).
    # TODO(synk): replace with a masked tail store to avoid the extra copies.
    rows = pl.cdiv(n, _LANES)
    rows_p = _round_up(rows, sub)
    xf = jnp.pad(x.reshape(-1), (0, rows_p * _LANES - n))
    br = _pick_block_rows(rows_p, block_rows, sub)
    out = _mish_2d(xf.reshape(rows_p, _LANES), br)
    return out.reshape(-1)[:n].reshape(orig_shape)


# ----------------------------------------------------------------------------
# Pure-JAX reference (matches torch: x * tanh(F.softplus(x)))
# ----------------------------------------------------------------------------
def mish_reference(x):
    return x * jnp.tanh(jax.nn.softplus(x))


if __name__ == "__main__":
    B, C, H, W = 2, 4, 16, 16
    key = jax.random.PRNGKey(0)
    x = 3.0 * jax.random.normal(key, (B, C, H, W), jnp.float32)

    mish_jit = jax.jit(mish)
    out = jax.block_until_ready(mish_jit(x))
    assert out.shape == x.shape and out.dtype == x.dtype, (out.shape, out.dtype)

    ref = mish_reference(x)
    max_err = float(jnp.max(jnp.abs(out - ref)))
    assert jnp.allclose(out, ref, atol=1e-5, rtol=1e-5), max_err

    print("KERNEL_OK")
</pallas_src>

<mosaic_0001>
module attributes {stable_mosaic.version = 11 : i64} {
  func.func @_mish_kernel(%arg0: i32, %arg1: memref<8x128xf32, #tpu.memory_space<vmem>>, %arg2: memref<8x128xf32, #tpu.memory_space<vmem>>) attributes {dimension_semantics = [#tpu.dimension_semantics<parallel>], iteration_bounds = array<i64: 2>, scalar_prefetch = 0 : i64, scratch_operands = 0 : i64, tpu.core_type = #tpu.core_type<tc>, window_params = [{transform_indices = @transform_0, window_bounds = array<i64: 8, 128>}, {transform_indices = @transform_1, window_bounds = array<i64: 8, 128>}]} {
    %c0 = arith.constant 0 : index
    %c0_0 = arith.constant 0 : index
    %0 = vector.load %arg1[%c0, %c0_0] : memref<8x128xf32, #tpu.memory_space<vmem>>, vector<8x128xf32>
    %cst = arith.constant 2.000000e+01 : f32
    %1 = vector.broadcast %cst : f32 to vector<8x128xf32>
    %2 = arith.minimumf %0, %1 : vector<8x128xf32>
    %3 = math.exp %2 : vector<8x128xf32>
    %cst_1 = arith.constant 2.000000e+00 : f32
    %4 = vector.broadcast %cst_1 : f32 to vector<8x128xf32>
    %5 = arith.addf %3, %4 : vector<8x128xf32>
    %6 = arith.mulf %3, %5 : vector<8x128xf32>
    %cst_2 = arith.constant 2.000000e+00 : f32
    %7 = vector.broadcast %cst_2 : f32 to vector<8x128xf32>
    %8 = arith.addf %6, %7 : vector<8x128xf32>
    %9 = arith.divf %6, %8 : vector<8x128xf32>
    %10 = arith.mulf %0, %9 : vector<8x128xf32>
    %c0_3 = arith.constant 0 : index
    %c0_4 = arith.constant 0 : index
    %11 = vector.load %arg2[%c0_3, %c0_4] : memref<8x128xf32, #tpu.memory_space<vmem>>, vector<8x128xf32>
    tpu.vector_store %arg2[%c0_3, %c0_4], %10 {strides = array<i32>} : memref<8x128xf32, #tpu.memory_space<vmem>>, vector<8x128xf32>,
    return
  }
  func.func @transform_0(%arg0: i32) -> (i32, i32) {
    %c0_i32 = arith.constant 0 : i32
    %c0_i32_0 = arith.constant 0 : i32
    return %arg0, %c0_i32 : i32, i32
  }
  func.func @transform_1(%arg0: i32) -> (i32, i32) {
    %c0_i32 = arith.constant 0 : i32
    %c0_i32_0 = arith.constant 0 : i32
    return %arg0, %c0_i32 : i32, i32
  }
}

</mosaic_0001>

<llo_original>
// kernel: mish.1
$region0: #{mish.1}
  #allocation0 [shape = 'u32[]', space=smem, size = 0x4, offset = 0x4, fixed_abs, tag = 'smem constant byte address 0x4 - core index']
  #allocation1 [shape = 'u32[144,128]{1,0:T(1,128)}', space=vmem, size = 0x12000, scoped, tag = 'internal scratch']
  %s0 = inlined_call_operand.vmem [shape: f32[16,128], index: 0, kind: input, shape index: {}]
  %s1 = inlined_call_operand.vmem [shape: f32[16,128], index: 1, kind: output, shape index: {}]
  %s2 = sld [smem:[#allocation0]]
  $region37: #{mish.1} parent=0
    _
  %s4 = ssub.s32 1, %s2
  %s5 = scalar_select 0, %s4, %s2
  loop: start=0, step=1, limit=4
  $region2: #{mish.1} parent=0 // loop_pre_header
    _
  $region3: #{mish.1} parent=0 // loop_header
    %s7 = sphi 0, %s11
    %p8 = scmp.ge.s32.totalorder %s7, 4
    %s17 = sphi 0, %s19
    %s20 = sphi 0, %s17
    %s21 = sphi 0, %s20
    %s37 = sphi 0, %s21
    %s43 = sphi 0, %s45
    %s46 = sphi 0, %s43
    %s47 = sphi 0, %s46
    %s63 = sphi 0, %s47
  $region4: #{mish.1} parent=0 // loop_header_branch
    %10 = sbr.rel (%p8) target = $region8
  $region5: #{mish.1} parent=0 // loop_body
    %s12 = ssub.s32 %s7, 1
    %s13 = ssub.s32 %s7, 2
    %s14 = sadd.s32 %s7, 1
    %s15 = ssub.s32 %s7, %s14
    %p16 = scmp.eq.s32.totalorder %s15, 0
    %s18 = sadd.s32 %s17, 1
    %s19 = scalar_select %p16, %s17, %s18
    %p22 = pneg %p16
    %p23 = scmp.eq.s32.totalorder %s7, 1
    %p24 = por %p22, %p23
    %p25 = scmp.ne.s32.totalorder %s17, %s20
    %p26 = scmp.eq.s32.totalorder %s7, 0
    %p27 = por %p25, %p26
    %p28 = scmp.ne.s32.totalorder %s17, %s20
    %p29 = scmp.eq.s32.totalorder %s12, 1
    %p30 = por %p28, %p29
    %p31 = scmp.ne.s32.totalorder %s20, %s21
    %p32 = scmp.eq.s32.totalorder %s12, 0
    %p33 = por %p31, %p32
    %p34 = scmp.ne.s32.totalorder %s20, %s21
    %p35 = scmp.eq.s32.totalorder %s13, 1
    %p36 = por %p34, %p35
    %p38 = scmp.ne.s32.totalorder %s21, %s37
    %p39 = scmp.eq.s32.totalorder %s13, 0
    %p40 = por %p38, %p39
    %s41 = ssub.s32 %s7, %s14
    %p42 = scmp.eq.s32.totalorder %s41, 0
    %s44 = sadd.s32 %s43, 1
    %s45 = scalar_select %p42, %s43, %s44
    %p48 = pneg %p42
    %p49 = scmp.eq.s32.totalorder %s7, 1
    %p50 = por %p48, %p49
    %p51 = scmp.ne.s32.totalorder %s43, %s46
    %p52 = scmp.eq.s32.totalorder %s7, 0
    %p53 = por %p51, %p52
    %p54 = scmp.ne.s32.totalorder %s43, %s46
    %p55 = scmp.eq.s32.totalorder %s12, 1
    %p56 = por %p54, %p55
    %p57 = scmp.ne.s32.totalorder %s46, %s47
    %p58 = scmp.eq.s32.totalorder %s12, 0
    %p59 = por %p57, %p58
    %p60 = scmp.ne.s32.totalorder %s46, %s47
    %p61 = scmp.eq.s32.totalorder %s13, 1
    %p62 = por %p60, %p61
    %p64 = scmp.ne.s32.totalorder %s47, %s63
    %p65 = scmp.eq.s32.totalorder %s13, 0
    %p66 = por %p64, %p65
    %p67 = scmp.le.s32.totalorder 1, %s7
    %p68 = scmp.lt.s32.totalorder %s7, 3
    %p69 = pnand %p67, %p68
    %p70 = pneg %p69
    // Predicated region
    $region9: #{mish.1} parent=5 // pred_check
      _
    $region10: #{mish.1} parent=5 // pred_check_branch
      %72 = sbr.rel (%p69) target = $region12
    $region11: #{mish.1} parent=5 // pred_region
      %s73 = ssub.s32 %s7, 1
    $region12: #{mish.1} parent=5 // pred_fallthru
      _
    %p74 = scmp.lt.s32.totalorder %s7, 2
    // Predicated region
    $region13: #{mish.1} parent=5 // pred_check
      %p75 = pneg %p74
    $region14: #{mish.1} parent=5 // pred_check_branch
      %77 = sbr.rel (%p75) target = $region16
    $region15: #{mish.1} parent=5 // pred_region
      // Predicated region
      $region17: #{mish.1} parent=15 // pred_check
        %p78 = pneg %p27
      $region18: #{mish.1} parent=15 // pred_check_branch
        %80 = sbr.rel (%p78) target = $region20
      $region19: #{mish.1} parent=15 // pred_region
        %p81 = scmp.lt.s32.totalorder %s7, 1
        %s82 = scalar_select %p81, %s7, 1
        %s83 = smul.addr %s82, 8
        %s84 = scalar_lea.vmem %s0, %s83
      $region20: #{mish.1} parent=15 // pred_fallthru
        _
    $region16: #{mish.1} parent=5 // pred_fallthru
      _
    %p85 = scmp.le.s32.totalorder 1, %s7
    %p86 = scmp.lt.s32.totalorder %s7, 3
    %p87 = pnand %p85, %p86
    %p88 = pneg %p87
    // Predicated region
    $region21: #{mish.1} parent=5 // pred_check
      _
    $region22: #{mish.1} parent=5 // pred_check_branch
      %90 = sbr.rel (%p87) target = $region24
    $region23: #{mish.1} parent=5 // pred_region
      %s91 = ssub.s32 %s7, 1
      %p92 = scmp.lt.s32.totalorder %s12, 1
      %s93 = scalar_select %p92, %s12, 1
      %s94 = smul.addr %s93, 8
      %s95 = scalar_lea.vmem %s0, %s94
      %p96 = pneg %p33
      %p97 = pneg %p30
      %p98 = pneg %p59
      %p99 = pneg %p56
      %p100 = scmp.lt.s32.totalorder %s12, 1
      %s101 = scalar_select %p100, %s12, 1
      %s102 = smul.addr %s101, 8
      %s103 = scalar_lea.vmem %s1, %s102
      %p104 = scmp.lt.s32.totalorder %s12, 1
      %s105 = scalar_select %p104, %s12, 1
      %s106 = smul.addr %s105, 8
      %s107 = scalar_lea.vmem %s0, %s106
      %p108 = scmp.lt.s32.totalorder %s12, 1
      %s109 = scalar_select %p108, %s12, 1
      %s110 = smul.addr %s109, 8
      %s111 = scalar_lea.vmem %s1, %s110
      %v112 = vld [vmem:[%s107] sm:$0xff]
      %v113 = vmin.f32 %v112, 20.0
      %v114 = vmul.f32 %v113, 1.442695
      %v115 = vpow.pop %v114
      %v116 = vadd.f32 %v115, 2.0
      %v117 = vmul.f32 %v115, %v116
      %v118 = vadd.f32 %v117, 2.0
      %v119 = vrcp.pop %v118
      %v120 = vmul.f32 %v117, %v119
      %v121 = vmul.f32 %v112, %v120
      %122 = vst [vmem:[%s111] sm:$0xff] %v121
      %p123 = scmp.lt.s32.totalorder %s12, 1
      %s124 = scalar_select %p123, %s12, 1
      %s125 = smul.addr %s124, 8
      %s126 = scalar_lea.vmem %s1, %s125
      // Predicated region
      $region25: #{mish.1} parent=23 // pred_check
        %p127 = pneg %p56
      $region26: #{mish.1} parent=23 // pred_check_branch
        %129 = sbr.rel (%p127) target = $region28
      $region27: #{mish.1} parent=23 // pred_region
        _
      $region28: #{mish.1} parent=23 // pred_fallthru
        _
    $region24: #{mish.1} parent=5 // pred_fallthru
      _
    %p130 = scmp.le.s32.totalorder 2, %s7
    // Predicated region
    $region29: #{mish.1} parent=5 // pred_check
      %p131 = pneg %p130
    $region30: #{mish.1} parent=5 // pred_check_branch
      %133 = sbr.rel (%p131) target = $region32
    $region31: #{mish.1} parent=5 // pred_region
      %s134 = ssub.s32 %s7, 2
      // Predicated region
      $region33: #{mish.1} parent=31 // pred_check
        %p135 = pneg %p62
      $region34: #{mish.1} parent=31 // pred_check_branch
        %137 = sbr.rel (%p135) target = $region36
      $region35: #{mish.1} parent=31 // pred_region
        %p138 = scmp.lt.s32.totalorder %s13, 1
        %s139 = scalar_select %p138, %s13, 1
        %s140 = smul.addr %s139, 8
        %s141 = scalar_lea.vmem %s1, %s140
      $region36: #{mish.1} parent=31 // pred_fallthru
        _
    $region32: #{mish.1} parent=5 // pred_fallthru
      _
  $region6: #{mish.1} parent=0 // loop_footer
    %s11 = sadd.s32 1, %s7
  $region7: #{mish.1} parent=0 // loop_footer_branch
    %6 = sbr.rel target = $region3
  $region8: #{mish.1} parent=0 // loop_exit
    _

</llo_original>
